<compile_context>
chip_gen: v7x
topology: tpu7x:2x2x1
jax: 0.10.0
libtpu: 0.0.40
codegen_flags: <defaults>
</compile_context>

<pallas_src>
import jax
import jax.numpy as jnp
from jax.experimental import pallas as pl
from jax.experimental.pallas import tpu as pltpu


def _round_up(x, m):
    return ((x + m - 1) // m) * m


def _vmem_capacity_bytes():
    """Physical VMEM of the current TPU generation (conservative fallback)."""
    try:
        info = pltpu.get_tpu_info()
        cap = getattr(info, "vmem_capacity_bytes", None)
        if cap:
            return int(cap)
    except Exception:
        pass
    return 64 * 1024 * 1024  # v7x per-TensorCore size: safe lower bound


def _ann_kernel(xT_ref, w1t_ref, b1t_ref, w2r_ref, b2_ref, out_ref):
    # xT_ref:  (7, TB)  current batch tile, batch on lanes
    # w1t_ref: (L, 7)   encoder weight (transposed), VMEM-resident across tiles
    # b1t_ref: (L, 1)   encoder bias column
    # w2r_ref: (1, L)   decoder weight row
    # b2_ref:  (1, 1)   decoder bias
    # out_ref: (1, TB)  lane-dense output tile (unmasked stores)
    latent = jnp.dot(w1t_ref[...], xT_ref[...],
                     preferred_element_type=jnp.float32)          # MXU, K=7
    latent = jnp.maximum(latent + b1t_ref[...], 0.0)              # (L, TB) f32
    # Layer 2 also on the MXU (M=1, K=L) instead of VALU mul + XLU reduce:
    # the MXU is nearly idle and VALU is the next binder on v6e/v7x.
    recon = jnp.dot(w2r_ref[...], latent,
                    preferred_element_type=jnp.float32) + b2_ref[...]
    out_ref[...] = jnp.maximum(recon, 0.0).astype(out_ref.dtype)  # (1, TB)


def ann_forward(x, w1, b1, w2, b2, *, x_dtype=jnp.float32, tile_b=None,
                x_feature_major=False):
    """PyTorch ANN.forward: x (B, 7) -> (B, 1, 1).

    Params in PyTorch-Linear-like (in, out) storage:
      w1: (7, L), b1: (1, L), w2: (L, 1), b2: (1, 1)

    x_dtype=jnp.bfloat16 halves the dominant HBM read (small numeric deviation
    from fp32 PyTorch).  x_feature_major=True means x is already (7, B) —
    skips the wrapper transpose pass.
    """
    if x_feature_major:
        F, B = x.shape
    else:
        B, F = x.shape
    L = w1.shape[1]
    assert w1.shape[0] == F

    x_bytes = jnp.dtype(x_dtype).itemsize

    # --- VMEM budget & batch-tile selection (per TPU generation) -------------
    vmem_cap = _vmem_capacity_bytes()
    # 64 MiB scoped limit on 128 MiB parts (v5e/v6e need it raised above their
    # 16/32 MiB defaults); 32 MiB on a 64 MiB part (v7x) — well under physical.
    vmem_limit = min(64 * 1024 * 1024, vmem_cap // 2)

    if tile_b is None:
        # Bytes per batch lane: double-buffered x tile (padded to 8 sublanes),
        # double-buffered f32 out tile (padded to 8 sublanes), latent + a
        # couple of f32 temporaries of shape (L, tb).
        per_lane = 2 * 8 * x_bytes + 2 * 8 * 4 + 3 * L * 4
        budget = vmem_limit // 2  # headroom for Mosaic-internal scratch
        tile_b = max(1024, min(65536, (budget // per_lane) // 128 * 128))

    # Keep >= ~4 grid steps (>= 2 per TensorCore on dual-core chips) when the
    # batch allows: preserves pipeline overlap / megacore sharding and bounds
    # padding waste.  Tiles stay multiples of 128 lanes -> unmasked lane-dense
    # output stores.
    b128 = _round_up(B, 128)
    tb = max(128, min(tile_b, _round_up(pl.cdiv(b128, 4), 128)))
    b_pad = _round_up(B, tb)
    grid = (b_pad // tb,)

    # --- Layout plumbing (fused XLA ops) --------------------------------------
    xw = x.astype(x_dtype)
    if not x_feature_major:
        xw = xw.T                                    # (7, B): batch -> lane axis
    if b_pad != B:
        xw = jnp.pad(xw, ((0, 0), (0, b_pad - B)))   # zero lanes; sliced off below
    w1t = w1.T.astype(x_dtype)                       # (L, 7) — MXU-native dtype
    b1t = b1.reshape(L, 1).astype(jnp.float32)       # (L, 1)
    w2r = w2.reshape(1, L).astype(jnp.float32)       # (1, L)
    b2r = b2.reshape(1, 1).astype(jnp.float32)       # (1, 1)

    # Advisory cost hint: memory-bound, tiny FLOPs.  Includes the upstream
    # pad/transpose copy of x when the caller supplies PyTorch (B, 7) layout.
    flops = 2 * b_pad * L * (F + 1) + 4 * b_pad * L + 2 * b_pad
    bytes_accessed = (b_pad * F * x_bytes + b_pad * 4
                      + 4 * (F * L + 2 * L + 1)
                      + (0 if x_feature_major else 2 * B * F * x_bytes))

    out = pl.pallas_call(
        _ann_kernel,
        out_shape=jax.ShapeDtypeStruct((1, b_pad), jnp.float32),
        grid_spec=pl.GridSpec(
            grid=grid,
            in_specs=[
                # x tile marches along the batch (lane) axis.
                pl.BlockSpec((F, tb), lambda i: (0, i)),
                # Weights/biases: constant index maps -> VMEM-resident, no
                # per-tile weight DMA.
                pl.BlockSpec((L, F), lambda i: (0, 0)),
                pl.BlockSpec((L, 1), lambda i: (0, 0)),
                pl.BlockSpec((1, L), lambda i: (0, 0)),
                pl.BlockSpec((1, 1), lambda i: (0, 0)),
            ],
            out_specs=pl.BlockSpec((1, tb), lambda i: (0, i)),
        ),
        compiler_params=pltpu.CompilerParams(
            # Independent batch tiles: shard across TensorCores on multi-core
            # chips (v7x); harmless on single-TC v5e/v6e.
            dimension_semantics=("parallel",),
            vmem_limit_bytes=vmem_limit,
        ),
        cost_estimate=pl.CostEstimate(
            flops=flops, transcendentals=0, bytes_accessed=bytes_accessed),
    )(xw, w1t, b1t, w2r, b2r)

    # PyTorch: x.unsqueeze(1) => output shape (B, 1, 1). Drop padded lanes.
    return out[0, :B].reshape(B, 1, 1)


def init_params(latent_size, key):
    """Deterministic parameter init (uniform, PyTorch-Linear-like bounds)."""
    k1, k2, k3, k4 = jax.random.split(key, 4)
    in1, out1 = 7, latent_size
    in2, out2 = latent_size, 1
    bound1 = 1.0 / jnp.sqrt(in1)
    bound2 = 1.0 / jnp.sqrt(in2)
    w1 = jax.random.uniform(k1, (in1, out1), jnp.float32, -bound1, bound1)
    b1 = jax.random.uniform(k2, (1, out1), jnp.float32, -bound1, bound1)
    w2 = jax.random.uniform(k3, (in2, out2), jnp.float32, -bound2, bound2)
    b2 = jax.random.uniform(k4, (1, out2), jnp.float32, -bound2, bound2)
    return w1, b1, w2, b2


def _reference(x, w1, b1, w2, b2):
    latent = jnp.maximum(x[:, None, :] @ w1 + b1, 0.0)
    return jnp.maximum(latent @ w2 + b2, 0.0)


if __name__ == "__main__":
    key = jax.random.PRNGKey(0)
    kx, kx2, kx3, kp = jax.random.split(key, 4)

    latent_size = 32
    w1, b1, w2, b2 = init_params(latent_size, kp)

    # 1) Small batch (single tile + lane padding path), f32, default tiling.
    batch = 8
    x = jax.random.normal(kx, (batch, 7), jnp.float32)
    out = ann_forward(x, w1, b1, w2, b2)
    jax.block_until_ready(out)
    ref = _reference(x, w1, b1, w2, b2)
    assert out.shape == (batch, 1, 1), out.shape
    assert jnp.allclose(out, ref, atol=1e-5, rtol=1e-5)

    # 2) Multi-tile grid (batch not a multiple of the tile), explicit tile.
    batch2 = 300
    x2 = jax.random.normal(kx2, (batch2, 7), jnp.float32)
    out2 = ann_forward(x2, w1, b1, w2, b2, tile_b=128)
    jax.block_until_ready(out2)
    ref2 = _reference(x2, w1, b1, w2, b2)
    assert out2.shape == (batch2, 1, 1), out2.shape
    assert jnp.allclose(out2, ref2, atol=1e-5, rtol=1e-5)

    # 2b) Feature-major fast path: caller supplies x as (7, B), no wrapper
    #     transpose pass over HBM.
    out2b = ann_forward(x2.T, w1, b1, w2, b2, tile_b=128, x_feature_major=True)
    jax.block_until_ready(out2b)
    assert out2b.shape == (batch2, 1, 1), out2b.shape
    assert jnp.allclose(out2b, ref2, atol=1e-5, rtol=1e-5)

    # 3) Larger batch exercising the auto tile/grid clamp + bf16 HBM reads.
    batch3 = 4096
    x3 = jax.random.normal(kx3, (batch3, 7), jnp.float32)
    out3 = ann_forward(x3, w1, b1, w2, b2, x_dtype=jnp.bfloat16)
    jax.block_until_ready(out3)
    x3_bf = x3.astype(jnp.bfloat16).astype(jnp.float32)
    w1_bf = w1.astype(jnp.bfloat16).astype(jnp.float32)
    ref3 = _reference(x3_bf, w1_bf, b1, w2, b2)
    assert out3.shape == (batch3, 1, 1), out3.shape
    assert jnp.allclose(out3, ref3, atol=1e-4, rtol=1e-3)

    print("KERNEL_OK")
</pallas_src>

<mosaic_0001>
module attributes {stable_mosaic.version = 11 : i64} {
  func.func @_ann_kernel(%arg0: i32, %arg1: memref<7x128xf32, #tpu.memory_space<vmem>>, %arg2: memref<32x7xf32, #tpu.memory_space<vmem>>, %arg3: memref<32x1xf32, #tpu.memory_space<vmem>>, %arg4: memref<1x32xf32, #tpu.memory_space<vmem>>, %arg5: memref<1x1xf32, #tpu.memory_space<vmem>>, %arg6: memref<1x128xf32, #tpu.memory_space<vmem>>) attributes {dimension_semantics = [#tpu.dimension_semantics<parallel>], iteration_bounds = array<i64: 1>, scalar_prefetch = 0 : i64, scratch_operands = 0 : i64, tpu.core_type = #tpu.core_type<tc>, window_params = [{transform_indices = @transform_0, window_bounds = array<i64: 7, 128>}, {pipeline_mode = #tpu.pipeline_mode<synchronous>, transform_indices = @transform_1, window_bounds = array<i64: 32, 7>}, {pipeline_mode = #tpu.pipeline_mode<synchronous>, transform_indices = @transform_2, window_bounds = array<i64: 32, 1>}, {pipeline_mode = #tpu.pipeline_mode<synchronous>, transform_indices = @transform_3, window_bounds = array<i64: 1, 32>}, {pipeline_mode = #tpu.pipeline_mode<synchronous>, transform_indices = @transform_4, window_bounds = array<i64: 1, 1>}, {transform_indices = @transform_5, window_bounds = array<i64: 1, 128>}]} {
    %c0 = arith.constant 0 : index
    %c0_0 = arith.constant 0 : index
    %0 = vector.load %arg2[%c0, %c0_0] : memref<32x7xf32, #tpu.memory_space<vmem>>, vector<32x7xf32>
    %c0_1 = arith.constant 0 : index
    %c0_2 = arith.constant 0 : index
    %1 = vector.load %arg1[%c0_1, %c0_2] : memref<7x128xf32, #tpu.memory_space<vmem>>, vector<7x128xf32>
    %cst = arith.constant dense<0.000000e+00> : vector<32x128xf32>
    %2 = tpu.matmul %0, %1, %cst {dimension_numbers = #tpu.dot_dimension_numbers<[1], [0], [0], [1], [0, 0, 1, 1], [], []>} : vector<32x7xf32>, vector<7x128xf32>, vector<32x128xf32> -> vector<32x128xf32>
    %c0_3 = arith.constant 0 : index
    %c0_4 = arith.constant 0 : index
    %3 = vector.load %arg3[%c0_3, %c0_4] : memref<32x1xf32, #tpu.memory_space<vmem>>, vector<32x1xf32>
    %4 = vector.broadcast %3 : vector<32x1xf32> to vector<32x128xf32>
    %5 = arith.addf %2, %4 : vector<32x128xf32>
    %cst_5 = arith.constant 0.000000e+00 : f32
    %6 = vector.broadcast %cst_5 : f32 to vector<32x128xf32>
    %7 = arith.maximumf %5, %6 : vector<32x128xf32>
    %c0_6 = arith.constant 0 : index
    %c0_7 = arith.constant 0 : index
    %8 = vector.load %arg4[%c0_6, %c0_7] : memref<1x32xf32, #tpu.memory_space<vmem>>, vector<1x32xf32>
    %cst_8 = arith.constant dense<0.000000e+00> : vector<1x128xf32>
    %9 = tpu.matmul %8, %7, %cst_8 {dimension_numbers = #tpu.dot_dimension_numbers<[1], [0], [0], [1], [0, 0, 1, 1], [], []>} : vector<1x32xf32>, vector<32x128xf32>, vector<1x128xf32> -> vector<1x128xf32>
    %c0_9 = arith.constant 0 : index
    %c0_10 = arith.constant 0 : index
    %10 = vector.load %arg5[%c0_9, %c0_10] : memref<1x1xf32, #tpu.memory_space<vmem>>, vector<1x1xf32>
    %11 = vector.broadcast %10 : vector<1x1xf32> to vector<1x128xf32>
    %12 = arith.addf %9, %11 : vector<1x128xf32>
    %cst_11 = arith.constant 0.000000e+00 : f32
    %13 = vector.broadcast %cst_11 : f32 to vector<1x128xf32>
    %14 = arith.maximumf %12, %13 : vector<1x128xf32>
    %c0_12 = arith.constant 0 : index
    %c0_13 = arith.constant 0 : index
    %15 = vector.load %arg6[%c0_12, %c0_13] : memref<1x128xf32, #tpu.memory_space<vmem>>, vector<1x128xf32>
    tpu.vector_store %arg6[%c0_12, %c0_13], %14 {strides = array<i32>} : memref<1x128xf32, #tpu.memory_space<vmem>>, vector<1x128xf32>,
    return
  }
  func.func @transform_0(%arg0: i32) -> (i32, i32) {
    %c0_i32 = arith.constant 0 : i32
    %c0_i32_0 = arith.constant 0 : i32
    return %c0_i32, %arg0 : i32, i32
  }
  func.func @transform_1(%arg0: i32) -> (i32, i32) {
    %c0_i32 = arith.constant 0 : i32
    %c0_i32_0 = arith.constant 0 : i32
    %c0_i32_1 = arith.constant 0 : i32
    return %c0_i32, %c0_i32_0 : i32, i32
  }
  func.func @transform_2(%arg0: i32) -> (i32, i32) {
    %c0_i32 = arith.constant 0 : i32
    %c0_i32_0 = arith.constant 0 : i32
    %c0_i32_1 = arith.constant 0 : i32
    return %c0_i32, %c0_i32_0 : i32, i32
  }
  func.func @transform_3(%arg0: i32) -> (i32, i32) {
    %c0_i32 = arith.constant 0 : i32
    %c0_i32_0 = arith.constant 0 : i32
    %c0_i32_1 = arith.constant 0 : i32
    return %c0_i32, %c0_i32_0 : i32, i32
  }
  func.func @transform_4(%arg0: i32) -> (i32, i32) {
    %c0_i32 = arith.constant 0 : i32
    %c0_i32_0 = arith.constant 0 : i32
    %c0_i32_1 = arith.constant 0 : i32
    return %c0_i32, %c0_i32_0 : i32, i32
  }
  func.func @transform_5(%arg0: i32) -> (i32, i32) {
    %c0_i32 = arith.constant 0 : i32
    %c0_i32_0 = arith.constant 0 : i32
    return %c0_i32, %arg0 : i32, i32
  }
}

</mosaic_0001>

<llo_original>
// kernel: tpu_custom_call.1
$region0: #{tpu_custom_call.1}
  #allocation0 [shape = 'u32[]', space=smem, size = 0x4, offset = 0x4, fixed_abs, tag = 'smem constant byte address 0x4 - core index']
  #allocation1 [shape = 'u32[144,128]{1,0:T(1,128)}', space=vmem, size = 0x12000, scoped, tag = 'internal scratch']
  #allocation2 [shape = 'f32[1,1]{1,0:T(1,128)S(1)}', space=vmem, size = 0x200, scoped, tag = 'scoped memory for tpu_custom_call.1']
  %s0 = inlined_call_operand.vmem [shape: f32[7,128], index: 0, kind: input, shape index: {}]
  %s1 = inlined_call_operand.vmem [shape: f32[32,7], index: 1, kind: input, shape index: {}]
  %s2 = inlined_call_operand.vmem [shape: f32[32,1], index: 2, kind: input, shape index: {}]
  %s3 = inlined_call_operand.vmem [shape: f32[1,32], index: 3, kind: input, shape index: {}]
  %s4 = inlined_call_operand.<no memory space> [shape: f32[1,1], index: 4, kind: input, shape index: {}]
  %s5 = inlined_call_operand.hbm [shape: f32[1,128], index: 5, kind: output, shape index: {}]
  %s6 = sld [smem:[#allocation0]]
  $region30: #{tpu_custom_call.1} parent=0
    _
  %s8 = ssub.s32 1, %s6
  %s9 = scalar_select 0, %s8, %s6
  %v10 = vstv %s4
  %11 = vst [vmem:[#allocation2] sm:$0x1] %v10
  $region1: #{tpu_custom_call.1} parent=0
    #allocation3 [shape = 'u8[512]{0}', space=vmem, size = 0x400, scoped, tag = 'output window, operand 0, single buffered']
    #allocation4 [shape = 's32[1]{0}', space=sflag, size = 0x4, scoped, tag = 'scoped memory for tpu_custom_call.1']
    %12 = vsyncpa [#allocation4], 0
    // Predicated region
    $region2: #{tpu_custom_call.1} parent=1 // pred_check
      _
    $region3: #{tpu_custom_call.1} parent=1 // pred_check_branch
      %14 = sbr.rel (0) target = $region5
    $region4: #{tpu_custom_call.1} parent=1 // pred_region
      _
    $region5: #{tpu_custom_call.1} parent=1 // pred_fallthru
      _
    // Predicated region
    $region6: #{tpu_custom_call.1} parent=1 // pred_check
      _
    $region7: #{tpu_custom_call.1} parent=1 // pred_check_branch
      %16 = sbr.rel (0) target = $region9
    $region8: #{tpu_custom_call.1} parent=1 // pred_region
      _
    $region9: #{tpu_custom_call.1} parent=1 // pred_fallthru
      _
    // Predicated region
    $region10: #{tpu_custom_call.1} parent=1 // pred_check
      _
    $region11: #{tpu_custom_call.1} parent=1 // pred_check_branch
      %18 = sbr.rel (0) target = $region13
    $region12: #{tpu_custom_call.1} parent=1 // pred_region
      _
    $region13: #{tpu_custom_call.1} parent=1 // pred_fallthru
      _
    // Predicated region
    $region14: #{tpu_custom_call.1} parent=1 // pred_check
      _
    $region15: #{tpu_custom_call.1} parent=1 // pred_check_branch
      %20 = sbr.rel (0) target = $region17
    $region16: #{tpu_custom_call.1} parent=1 // pred_region
      _
    $region17: #{tpu_custom_call.1} parent=1 // pred_fallthru
      _
    // Predicated region
    $region18: #{tpu_custom_call.1} parent=1 // pred_check
      _
    $region19: #{tpu_custom_call.1} parent=1 // pred_check_branch
      %22 = sbr.rel (0) target = $region21
    $region20: #{tpu_custom_call.1} parent=1 // pred_region
      _
    $region21: #{tpu_custom_call.1} parent=1 // pred_fallthru
      _
    %v23 = vld [vmem:[%s1] sm:$0xff]
    %v24 = vld [vmem:[%s1 + $0x8] sm:$0xff]
    %v25 = vld [vmem:[%s1 + $0x10] sm:$0xff]
    %v26 = vld [vmem:[%s1 + $0x18] sm:$0xff]
    %v27 = vld [vmem:[%s0] sm:$0x7f]
    %v28 = vld [vmem:[%s2] sm:$0xff]
    %v29 = vld [vmem:[%s2 + $0x8] sm:$0xff]
    %v30 = vld [vmem:[%s2 + $0x10] sm:$0xff]
    %v31 = vld [vmem:[%s2 + $0x18] sm:$0xff]
    %33 = vset.pattern.permute.xlu0 0
    %34 = vperm.xlu0 %33, %v28
    %v35 = vpop.permute.xlu0 %34
    %38 = vset.pattern.permute.xlu0 0
    %39 = vperm.xlu0 %38, %v29
    %v40 = vpop.permute.xlu0 %39
    %43 = vset.pattern.permute.xlu0 0
    %44 = vperm.xlu0 %43, %v30
    %v45 = vpop.permute.xlu0 %44
    %48 = vset.pattern.permute.xlu0 0
    %49 = vperm.xlu0 %48, %v31
    %v50 = vpop.permute.xlu0 %49
    %vm52 = vcmask 56320
    %v54 = vsel %vm52, %v23, 0
    %v57 = vsel %vm52, %v24, 0
    %v60 = vsel %vm52, %v25, 0
    %v63 = vsel %vm52, %v26, 0
    %vm65 = vcmask 1046528
    %v67 = vsel %vm65, %v27, 0
    %69 = vmatprep.subr.mxu0 0.0
    %70 = vmatpush1.msra.mxu0 %v67
    %71 = vmatprep.subr.mxu0 0.0
    %72 = vmatpush1.msra.mxu0 0.0
    %73 = vmatprep.subr.mxu0 0.0
    %74 = vmatpush1.msra.mxu0 0.0
    %75 = vmatprep.subr.mxu0 0.0
    %76 = vmatpush1.msra.mxu0 0.0
    %77 = vmatprep.subr.mxu0 0.0
    %78 = vmatpush1.msra.mxu0 0.0
    %79 = vmatprep.subr.mxu0 0.0
    %80 = vmatpush1.msra.mxu0 0.0
    %81 = vmatprep.subr.mxu0 0.0
    %82 = vmatpush1.msra.mxu0 0.0
    %83 = vmatprep.subr.mxu0 0.0
    %84 = vmatpush1.msra.mxu0 0.0
    %85 = vmatprep.subr.mxu0 0.0
    %86 = vmatpush1.msra.mxu0 0.0
    %87 = vmatprep.subr.mxu0 0.0
    %88 = vmatpush1.msra.mxu0 0.0
    %89 = vmatprep.subr.mxu0 0.0
    %90 = vmatpush1.msra.mxu0 0.0
    %91 = vmatprep.subr.mxu0 0.0
    %92 = vmatpush1.msra.mxu0 0.0
    %93 = vmatprep.subr.mxu0 0.0
    %94 = vmatpush1.msra.mxu0 0.0
    %95 = vmatprep.subr.mxu0 0.0
    %96 = vmatpush1.msra.mxu0 0.0
    %97 = vmatprep.subr.mxu0 0.0
    %98 = vmatpush1.msra.mxu0 0.0
    %99 = vmatprep.subr.mxu0 0.0
    %100 = vmatpush1.msra.mxu0 0.0
    %101 = vmatprep.subr.mxu0 0.0
    %102 = vmatpush1.msra.mxu0 0.0
    %103 = vmatprep.subr.mxu0 0.0
    %104 = vmatpush1.msra.mxu0 0.0
    %105 = vmatprep.subr.mxu0 0.0
    %106 = vmatpush1.msra.mxu0 0.0
    %107 = vmatprep.subr.mxu0 0.0
    %108 = vmatpush1.msra.mxu0 0.0
    %109 = vmatprep.subr.mxu0 0.0
    %110 = vmatpush1.msra.mxu0 0.0
    %111 = vmatprep.subr.mxu0 0.0
    %112 = vmatpush1.msra.mxu0 0.0
    %113 = vmatprep.subr.mxu0 0.0
    %114 = vmatpush1.msra.mxu0 0.0
    %115 = vmatprep.subr.mxu0 0.0
    %116 = vmatpush1.msra.mxu0 0.0
    %117 = vmatprep.subr.mxu0 0.0
    %118 = vmatpush1.msra.mxu0 0.0
    %119 = vmatprep.subr.mxu0 0.0
    %120 = vmatpush1.msra.mxu0 0.0
    %121 = vmatprep.subr.mxu0 0.0
    %122 = vmatpush1.msra.mxu0 0.0
    %123 = vmatprep.subr.mxu0 0.0
    %124 = vmatpush1.msra.mxu0 0.0
    %125 = vmatprep.subr.mxu0 0.0
    %126 = vmatpush1.msra.mxu0 0.0
    %127 = vmatprep.subr.mxu0 0.0
    %128 = vmatpush1.msra.mxu0 0.0
    %129 = vmatprep.subr.mxu0 0.0
    %130 = vmatpush1.msra.mxu0 0.0
    %131 = vmatprep.subr.mxu0 0.0
    %132 = vmatpush1.msra.mxu0 0.0
    %133 = vmatprep.mubr.f32.mxu0 0.0
    %134 = vmatmul.mubr.f32.gmra.mrb[0].mxu0 %v54
    %v135 = vpop.f32.mrb[0].mxu0
    %v136 = vadd.f32 %v35, %v135
    %v137 = vpop.f32.mrb[0].mxu0
    %138 = vmatprep.mubr.f32.mxu0 0.0
    %139 = vmatmul.mubr.f32.gmra.mrb[0].mxu0 %v57
    %v140 = vpop.f32.mrb[0].mxu0
    %v141 = vadd.f32 %v40, %v140
    %v142 = vpop.f32.mrb[0].mxu0
    %143 = vmatprep.mubr.f32.mxu0 0.0
    %144 = vmatmul.mubr.f32.gmra.mrb[0].mxu0 %v60
    %v145 = vpop.f32.mrb[0].mxu0
    %v146 = vadd.f32 %v45, %v145
    %v147 = vpop.f32.mrb[0].mxu0
    %148 = vmatprep.mubr.f32.mxu0 0.0
    %149 = vmatmul.mubr.f32.gmra.mrb[0].mxu0 %v63
    %v150 = vpop.f32.mrb[0].mxu0
    %v151 = vadd.f32 %v50, %v150
    %v152 = vpop.f32.mrb[0].mxu0
    %153 = vdwg.mxu0
    %v154 = vmax.f32 %v136, 0.0
    %v155 = vmax.f32 %v141, 0.0
    %v156 = vmax.f32 %v146, 0.0
    %v157 = vmax.f32 %v151, 0.0
    %v158 = vld [vmem:[%s3] sm:$0x1]
    %v159 = vld [vmem:[#allocation2] sm:$0x1]
    %161 = vset.pattern.permute.xlu0 0
    %162 = vperm.xlu0 %161, %v159
    %v163 = vpop.permute.xlu0 %162
    %v165 = vlaneseq
    %v166 = vshrl.u32 %v165, 7
    %v167 = vsub.s32 0, %v166
    %v168 = vrot.slane %v163, %v167
    %vm169 = vcmask 261120
    %v171 = vsel %vm169, %v158, 0
    %173 = vmatprep.subr.mxu0 0.0
    %174 = vmatpush1.msra.mxu0 %v154
    %175 = vmatprep.subr.mxu0 0.0
    %176 = vmatpush1.msra.mxu0 %v155
    %177 = vmatprep.subr.mxu0 0.0
    %178 = vmatpush1.msra.mxu0 %v156
    %179 = vmatprep.subr.mxu0 0.0
    %180 = vmatpush1.msra.mxu0 %v157
    %181 = vmatprep.subr.mxu0 0.0
    %182 = vmatpush1.msra.mxu0 0.0
    %183 = vmatprep.subr.mxu0 0.0
    %184 = vmatpush1.msra.mxu0 0.0
    %185 = vmatprep.subr.mxu0 0.0
    %186 = vmatpush1.msra.mxu0 0.0
    %187 = vmatprep.subr.mxu0 0.0
    %188 = vmatpush1.msra.mxu0 0.0
    %189 = vmatprep.subr.mxu0 0.0
    %190 = vmatpush1.msra.mxu0 0.0
    %191 = vmatprep.subr.mxu0 0.0
    %192 = vmatpush1.msra.mxu0 0.0
    %193 = vmatprep.subr.mxu0 0.0
    %194 = vmatpush1.msra.mxu0 0.0
    %195 = vmatprep.subr.mxu0 0.0
    %196 = vmatpush1.msra.mxu0 0.0
    %197 = vmatprep.subr.mxu0 0.0
    %198 = vmatpush1.msra.mxu0 0.0
    %199 = vmatprep.subr.mxu0 0.0
    %200 = vmatpush1.msra.mxu0 0.0
    %201 = vmatprep.subr.mxu0 0.0
    %202 = vmatpush1.msra.mxu0 0.0
    %203 = vmatprep.subr.mxu0 0.0
    %204 = vmatpush1.msra.mxu0 0.0
    %205 = vmatprep.subr.mxu0 0.0
    %206 = vmatpush1.msra.mxu0 0.0
    %207 = vmatprep.subr.mxu0 0.0
    %208 = vmatpush1.msra.mxu0 0.0
    %209 = vmatprep.subr.mxu0 0.0
    %210 = vmatpush1.msra.mxu0 0.0
    %211 = vmatprep.subr.mxu0 0.0
    %212 = vmatpush1.msra.mxu0 0.0
    %213 = vmatprep.subr.mxu0 0.0
    %214 = vmatpush1.msra.mxu0 0.0
    %215 = vmatprep.subr.mxu0 0.0
    %216 = vmatpush1.msra.mxu0 0.0
    %217 = vmatprep.subr.mxu0 0.0
    %218 = vmatpush1.msra.mxu0 0.0
    %219 = vmatprep.subr.mxu0 0.0
    %220 = vmatpush1.msra.mxu0 0.0
    %221 = vmatprep.subr.mxu0 0.0
    %222 = vmatpush1.msra.mxu0 0.0
    %223 = vmatprep.subr.mxu0 0.0
    %224 = vmatpush1.msra.mxu0 0.0
    %225 = vmatprep.subr.mxu0 0.0
    %226 = vmatpush1.msra.mxu0 0.0
    %227 = vmatprep.subr.mxu0 0.0
    %228 = vmatpush1.msra.mxu0 0.0
    %229 = vmatprep.subr.mxu0 0.0
    %230 = vmatpush1.msra.mxu0 0.0
    %231 = vmatprep.subr.mxu0 0.0
    %232 = vmatpush1.msra.mxu0 0.0
    %233 = vmatprep.subr.mxu0 0.0
    %234 = vmatpush1.msra.mxu0 0.0
    %235 = vmatprep.subr.mxu0 0.0
    %236 = vmatpush1.msra.mxu0 0.0
    %237 = vmatprep.mubr.f32.mxu0 0.0
    %238 = vmatmul.mubr.f32.gmra.mrb[0].mxu0 %v171
    %v239 = vpop.f32.mrb[0].mxu0
    %v240 = vadd.f32 %v168, %v239
    %v241 = vpop.f32.mrb[0].mxu0
    %242 = vdwg.mxu0
    %v243 = vmax.f32 %v240, 0.0
    %244 = vst [vmem:[#allocation3] sm:$0x1] %v243
    // Predicated region
    $region22: #{tpu_custom_call.1} parent=1 // pred_check
      _
    $region23: #{tpu_custom_call.1} parent=1 // pred_check_branch
      %246 = sbr.rel (0) target = $region25
    $region24: #{tpu_custom_call.1} parent=1 // pred_region
      %s248 = ssub.s32 16, 16
      %249 = vsyncadd [#allocation4], %s248
      %s251 = sshll.u32 [#allocation3], 4
      %s252 = int_to_ptr.vmem [resolvable:$true] %s251
      %254 = dma.vmem_to_hbm [thread:$0]  %s252, 16, %s5, [#allocation4]
    $region25: #{tpu_custom_call.1} parent=1 // pred_fallthru
      _
    // Predicated region
    $region26: #{tpu_custom_call.1} parent=1 // pred_check
      _
    $region27: #{tpu_custom_call.1} parent=1 // pred_check_branch
      %256 = sbr.rel (0) target = $region29
    $region28: #{tpu_custom_call.1} parent=1 // pred_region
      %257 = dma.done [#allocation4], 16
    $region29: #{tpu_custom_call.1} parent=1 // pred_fallthru
      _
    %258 = vsyncpa [#allocation4], 1

</llo_original>
